<compile_context>
chip_gen: v6e
topology: v6e:2x2x1
jax: 0.10.0
libtpu: 0.0.40
codegen_flags: <defaults>
</compile_context>

<pallas_src>
import functools

import jax
import jax.numpy as jnp
from jax.experimental import pallas as pl
from jax.experimental.pallas import tpu as pltpu

LANE = 128


def _round_up(v, m):
    return (v + m - 1) // m * m


# --------------------------------------------------------------------------- #
# kernels
# --------------------------------------------------------------------------- #
def _proj1_kernel(x_ref, w1_ref, b1_ref, p_ref, s_ref, *, h_pad):
    """Row tile: [P1 | S1pre] = x @ [Wl1 | Wr1]  (bf16 MXU, f32 accumulate)."""
    ps = jnp.dot(x_ref[...], w1_ref[...], preferred_element_type=jnp.float32)
    p_ref[...] = ps[:, :h_pad].astype(p_ref.dtype)
    s_ref[...] = (ps[:, h_pad:] + b1_ref[...]).astype(s_ref.dtype)


def _agg1_proj2_kernel(a_ref, p1_ref, s1_ref, inv_ref, w2_ref, b2_ref,
                       p2_ref, s2_ref, acc_ref, *, c_pad):
    """K-tiled: acc += A_ik @ P1_k; last k: h = relu(inv*acc + S1),
    [P2 | S2pre] = h @ [Wl2 | Wr2]."""
    k = pl.program_id(1)

    @pl.when(k == 0)
    def _():
        acc_ref[...] = jnp.zeros_like(acc_ref)

    acc_ref[...] += jnp.dot(a_ref[...].astype(jnp.bfloat16), p1_ref[...],
                            preferred_element_type=jnp.float32)

    @pl.when(k == pl.num_programs(1) - 1)
    def _():
        h = jnp.maximum(acc_ref[...] * inv_ref[...]
                        + s1_ref[...].astype(jnp.float32), 0.0)
        # (dropout is the identity at inference time)
        ps = jnp.dot(h.astype(jnp.bfloat16), w2_ref[...],
                     preferred_element_type=jnp.float32)
        p2_ref[...] = ps[:, :c_pad].astype(p2_ref.dtype)
        s2_ref[...] = ps[:, c_pad:] + b2_ref[...]


def _agg2_out_kernel(a_ref, p2_ref, s2_ref, inv_ref, o_ref, acc_ref, *,
                     num_classes):
    """K-tiled: acc += A_ik @ P2_k; last k: logits = inv*acc + S2, masked
    log_softmax over the real class columns."""
    k = pl.program_id(1)

    @pl.when(k == 0)
    def _():
        acc_ref[...] = jnp.zeros_like(acc_ref)

    acc_ref[...] += jnp.dot(a_ref[...].astype(jnp.bfloat16), p2_ref[...],
                            preferred_element_type=jnp.float32)

    @pl.when(k == pl.num_programs(1) - 1)
    def _():
        logits = acc_ref[...] * inv_ref[...] + s2_ref[...]
        # mask lane-padded class columns so they do not corrupt the softmax
        col = jax.lax.broadcasted_iota(jnp.int32, logits.shape, 1)
        logits = jnp.where(col < num_classes, logits, -jnp.inf)
        m = jnp.max(logits, axis=1, keepdims=True)
        z = logits - m
        lse = jnp.log(jnp.sum(jnp.exp(z), axis=1, keepdims=True))
        o_ref[...] = z - lse


# --------------------------------------------------------------------------- #
# wrapper
# --------------------------------------------------------------------------- #
def graphsage_net(x, edge_index, params, num_classes):
    n, f = x.shape
    hidden = params["w_l1"].shape[1]

    # Row / contraction tiles.  With K-tiling the per-step working set is
    # O(tm*tk + tk*128) regardless of N, so these only trade per-step overhead
    # against VMEM; grow them for bigger graphs.
    if n <= 1024:
        tm, tk = 256, 256
    elif n <= 8192:
        tm, tk = 256, 1024
    else:
        tm, tk = 512, 2048                  # tk is always a multiple of tm

    n_pad = _round_up(n, tk)
    f_pad = _round_up(f, LANE)
    h_pad = _round_up(hidden, LANE)
    c_pad = _round_up(num_classes, LANE)

    # --- glue (plain JAX, O(E) + one int8 N^2 write) ----------------------------
    src, dst = edge_index[0], edge_index[1]
    # degree via scatter-add over destinations (no N^2 f32 intermediate)
    deg = jnp.zeros((n_pad,), jnp.float32).at[dst].add(1.0)
    inv_deg = (1.0 / jnp.clip(deg, 1.0, None)).reshape(n_pad, 1)
    # dense adjacency built directly in the narrow streaming dtype
    # (int8 edge counts are exact up to 127 parallel edges)
    adj = jnp.zeros((n_pad, n_pad), jnp.int8).at[dst, src].add(
        jnp.ones_like(src, dtype=jnp.int8))

    def pad2(w, r, c, dtype=jnp.bfloat16):
        out = jnp.zeros((r, c), dtype)
        return out.at[: w.shape[0], : w.shape[1]].set(w.astype(dtype))

    x_p = pad2(x, n_pad, f_pad)                                        # bf16
    # fuse left/right projections into one 2*width (MXU-filling) dot per layer
    w1f = jnp.concatenate([pad2(params["w_l1"], f_pad, h_pad),
                           pad2(params["w_r1"], f_pad, h_pad)], axis=1)
    b1 = pad2(params["b_l1"].reshape(1, -1), 1, h_pad, jnp.float32)
    w2f = jnp.concatenate([pad2(params["w_l2"], h_pad, c_pad),
                           pad2(params["w_r2"], h_pad, c_pad)], axis=1)
    b2 = pad2(params["b_l2"].reshape(1, -1), 1, c_pad, jnp.float32)

    # 48 MiB leaves >=25% headroom below v7x's 64 MiB physical VMEM and is far
    # more than the tiled working set needs on any generation.
    vmem_limit = 48 * 1024 * 1024
    cparams_rows = pltpu.CompilerParams(
        dimension_semantics=("parallel",), vmem_limit_bytes=vmem_limit)
    cparams_agg = pltpu.CompilerParams(
        dimension_semantics=("parallel", "arbitrary"),
        vmem_limit_bytes=vmem_limit)

    # ---- call 1: per-row-tile fused projections of x ---------------------------
    grid_rows = (n_pad // tm,)
    p1, s1 = pl.pallas_call(
        functools.partial(_proj1_kernel, h_pad=h_pad),
        grid=grid_rows,
        in_specs=[pl.BlockSpec((tm, f_pad), lambda i: (i, 0)),
                  pl.BlockSpec((f_pad, 2 * h_pad), lambda i: (0, 0)),
                  pl.BlockSpec((1, h_pad), lambda i: (0, 0))],
        out_specs=[pl.BlockSpec((tm, h_pad), lambda i: (i, 0)),
                   pl.BlockSpec((tm, h_pad), lambda i: (i, 0))],
        out_shape=[jax.ShapeDtypeStruct((n_pad, h_pad), jnp.bfloat16),
                   jax.ShapeDtypeStruct((n_pad, h_pad), jnp.bfloat16)],
        compiler_params=cparams_rows,
    )(x_p, w1f, b1)

    # ---- call 2: K-tiled aggregate L1 + ReLU + fused projection into L2 --------
    grid_agg = (n_pad // tm, n_pad // tk)
    p2, s2 = pl.pallas_call(
        functools.partial(_agg1_proj2_kernel, c_pad=c_pad),
        grid=grid_agg,
        in_specs=[pl.BlockSpec((tm, tk), lambda i, k: (i, k)),       # A (int8)
                  pl.BlockSpec((tk, h_pad), lambda i, k: (k, 0)),    # P1 strip
                  pl.BlockSpec((tm, h_pad), lambda i, k: (i, 0)),    # S1 tile
                  pl.BlockSpec((tm, 1), lambda i, k: (i, 0)),        # inv_deg
                  pl.BlockSpec((h_pad, 2 * c_pad), lambda i, k: (0, 0)),
                  pl.BlockSpec((1, c_pad), lambda i, k: (0, 0))],
        out_specs=[pl.BlockSpec((tm, c_pad), lambda i, k: (i, 0)),
                   pl.BlockSpec((tm, c_pad), lambda i, k: (i, 0))],
        out_shape=[jax.ShapeDtypeStruct((n_pad, c_pad), jnp.bfloat16),
                   jax.ShapeDtypeStruct((n_pad, c_pad), jnp.float32)],
        scratch_shapes=[pltpu.VMEM((tm, h_pad), jnp.float32)],
        compiler_params=cparams_agg,
    )(adj, p1, s1, inv_deg, w2f, b2)

    # ---- call 3: K-tiled aggregate L2 + masked log_softmax ---------------------
    out = pl.pallas_call(
        functools.partial(_agg2_out_kernel, num_classes=num_classes),
        grid=grid_agg,
        in_specs=[pl.BlockSpec((tm, tk), lambda i, k: (i, k)),       # A (int8)
                  pl.BlockSpec((tk, c_pad), lambda i, k: (k, 0)),    # P2 strip
                  pl.BlockSpec((tm, c_pad), lambda i, k: (i, 0)),    # S2 tile
                  pl.BlockSpec((tm, 1), lambda i, k: (i, 0))],       # inv_deg
        out_specs=pl.BlockSpec((tm, c_pad), lambda i, k: (i, 0)),
        out_shape=jax.ShapeDtypeStruct((n_pad, c_pad), jnp.float32),
        scratch_shapes=[pltpu.VMEM((tm, c_pad), jnp.float32)],
        compiler_params=cparams_agg,
    )(adj, p2, s2, inv_deg)

    return out[:n, :num_classes]


# --------------------------------------------------------------------------- #
# pure-JAX reference (f32)
# --------------------------------------------------------------------------- #
def _reference(x, edge_index, params, num_classes):
    n = x.shape[0]
    src, dst = edge_index[0], edge_index[1]
    adj = jnp.zeros((n, n), jnp.float32).at[dst, src].add(1.0)
    deg = jnp.clip(jnp.sum(adj, axis=1, keepdims=True), 1.0, None)
    a_norm = adj / deg

    def layer(xx, wl, wr, b):
        return a_norm @ (xx @ wl) + xx @ wr + b

    h = jnp.maximum(layer(x, params["w_l1"], params["w_r1"], params["b_l1"]), 0.0)
    o = layer(h, params["w_l2"], params["w_r2"], params["b_l2"])
    return jax.nn.log_softmax(o, axis=1)


if __name__ == "__main__":
    # Small synthetic "dataset": 32 nodes, 16 node features, 8 classes, 64 edges.
    num_nodes, num_feat, hidden, num_classes, num_edges = 32, 16, 16, 8, 64

    key = jax.random.PRNGKey(0)
    kx, ke, k1, k2, k3, k4, k5, k6 = jax.random.split(key, 8)

    x = jax.random.normal(kx, (num_nodes, num_feat), jnp.float32)
    edge_index = jax.random.randint(ke, (2, num_edges), 0, num_nodes,
                                    dtype=jnp.int32)

    def glorot(k, shape):
        fan_in, fan_out = shape
        lim = (6.0 / (fan_in + fan_out)) ** 0.5
        return jax.random.uniform(k, shape, jnp.float32, -lim, lim)

    params = {
        # sage1: in=num_feat, out=hidden   (weights stored [in, out])
        "w_l1": glorot(k1, (num_feat, hidden)),
        "w_r1": glorot(k2, (num_feat, hidden)),
        "b_l1": 0.1 * jax.random.normal(k5, (hidden,), jnp.float32),
        # sage2: in=hidden, out=num_classes
        "w_l2": glorot(k3, (hidden, num_classes)),
        "w_r2": glorot(k4, (hidden, num_classes)),
        "b_l2": 0.1 * jax.random.normal(k6, (num_classes,), jnp.float32),
    }

    out = jax.block_until_ready(graphsage_net(x, edge_index, params, num_classes))
    ref = _reference(x, edge_index, params, num_classes)
    assert out.shape == (num_nodes, num_classes)
    # full bf16 MXU path (x, weights, P1/P2, S1 in bf16; int8 adjacency widened
    # to bf16) vs f32 reference -> loosened tolerance
    assert jnp.allclose(out, ref, atol=1e-1, rtol=5e-2), \
        float(jnp.max(jnp.abs(out - ref)))
    print("KERNEL_OK")
</pallas_src>

<mosaic_0001>
module attributes {stable_mosaic.version = 11 : i64} {
  func.func @_proj1_kernel(%arg0: i32, %arg1: memref<256x128xbf16, #tpu.memory_space<vmem>>, %arg2: memref<128x256xbf16, #tpu.memory_space<vmem>>, %arg3: memref<1x128xf32, #tpu.memory_space<vmem>>, %arg4: memref<256x128xbf16, #tpu.memory_space<vmem>>, %arg5: memref<256x128xbf16, #tpu.memory_space<vmem>>) attributes {dimension_semantics = [#tpu.dimension_semantics<parallel>], iteration_bounds = array<i64: 1>, scalar_prefetch = 0 : i64, scratch_operands = 0 : i64, tpu.core_type = #tpu.core_type<tc>, window_params = [{transform_indices = @transform_0, window_bounds = array<i64: 256, 128>}, {pipeline_mode = #tpu.pipeline_mode<synchronous>, transform_indices = @transform_1, window_bounds = array<i64: 128, 256>}, {pipeline_mode = #tpu.pipeline_mode<synchronous>, transform_indices = @transform_2, window_bounds = array<i64: 1, 128>}, {transform_indices = @transform_3, window_bounds = array<i64: 256, 128>}, {transform_indices = @transform_4, window_bounds = array<i64: 256, 128>}]} {
    %c0 = arith.constant 0 : index
    %c0_0 = arith.constant 0 : index
    %0 = vector.load %arg1[%c0, %c0_0] : memref<256x128xbf16, #tpu.memory_space<vmem>>, vector<256x128xbf16>
    %c0_1 = arith.constant 0 : index
    %c0_2 = arith.constant 0 : index
    %1 = vector.load %arg2[%c0_1, %c0_2] : memref<128x256xbf16, #tpu.memory_space<vmem>>, vector<128x256xbf16>
    %cst = arith.constant dense<0.000000e+00> : vector<256x256xf32>
    %2 = tpu.matmul %0, %1, %cst {dimension_numbers = #tpu.dot_dimension_numbers<[1], [0], [0], [1], [0, 0, 1, 1], [], []>} : vector<256x128xbf16>, vector<128x256xbf16>, vector<256x256xf32> -> vector<256x256xf32>
    %3 = vector.extract_strided_slice %2 {offsets = [0, 0], sizes = [256, 128], strides = [1, 1]} : vector<256x256xf32> to vector<256x128xf32>
    %4 = arith.truncf %3 : vector<256x128xf32> to vector<256x128xbf16>
    %c0_3 = arith.constant 0 : index
    %c0_4 = arith.constant 0 : index
    %5 = vector.load %arg4[%c0_3, %c0_4] : memref<256x128xbf16, #tpu.memory_space<vmem>>, vector<256x128xbf16>
    tpu.vector_store %arg4[%c0_3, %c0_4], %4 {strides = array<i32>} : memref<256x128xbf16, #tpu.memory_space<vmem>>, vector<256x128xbf16>,
    %6 = vector.extract_strided_slice %2 {offsets = [0, 128], sizes = [256, 128], strides = [1, 1]} : vector<256x256xf32> to vector<256x128xf32>
    %c0_5 = arith.constant 0 : index
    %c0_6 = arith.constant 0 : index
    %7 = vector.load %arg3[%c0_5, %c0_6] : memref<1x128xf32, #tpu.memory_space<vmem>>, vector<1x128xf32>
    %8 = vector.broadcast %7 : vector<1x128xf32> to vector<256x128xf32>
    %9 = arith.addf %6, %8 : vector<256x128xf32>
    %10 = arith.truncf %9 : vector<256x128xf32> to vector<256x128xbf16>
    %c0_7 = arith.constant 0 : index
    %c0_8 = arith.constant 0 : index
    %11 = vector.load %arg5[%c0_7, %c0_8] : memref<256x128xbf16, #tpu.memory_space<vmem>>, vector<256x128xbf16>
    tpu.vector_store %arg5[%c0_7, %c0_8], %10 {strides = array<i32>} : memref<256x128xbf16, #tpu.memory_space<vmem>>, vector<256x128xbf16>,
    return
  }
  func.func @transform_0(%arg0: i32) -> (i32, i32) {
    %c0_i32 = arith.constant 0 : i32
    %c0_i32_0 = arith.constant 0 : i32
    return %arg0, %c0_i32 : i32, i32
  }
  func.func @transform_1(%arg0: i32) -> (i32, i32) {
    %c0_i32 = arith.constant 0 : i32
    %c0_i32_0 = arith.constant 0 : i32
    %c0_i32_1 = arith.constant 0 : i32
    return %c0_i32, %c0_i32_0 : i32, i32
  }
  func.func @transform_2(%arg0: i32) -> (i32, i32) {
    %c0_i32 = arith.constant 0 : i32
    %c0_i32_0 = arith.constant 0 : i32
    %c0_i32_1 = arith.constant 0 : i32
    return %c0_i32, %c0_i32_0 : i32, i32
  }
  func.func @transform_3(%arg0: i32) -> (i32, i32) {
    %c0_i32 = arith.constant 0 : i32
    %c0_i32_0 = arith.constant 0 : i32
    return %arg0, %c0_i32 : i32, i32
  }
  func.func @transform_4(%arg0: i32) -> (i32, i32) {
    %c0_i32 = arith.constant 0 : i32
    %c0_i32_0 = arith.constant 0 : i32
    return %arg0, %c0_i32 : i32, i32
  }
}

</mosaic_0001>

<llo_original>
// kernel: tpu_custom_call.1
$region0: #{tpu_custom_call.1}
  #allocation0 [shape = 'u32[]', space=smem, size = 0x4, offset = 0x4, fixed_abs, tag = 'smem constant byte address 0x4 - core index']
  #allocation1 [shape = 'u32[144,128]{1,0:T(1,128)}', space=vmem, size = 0x12000, scoped, tag = 'internal scratch']
  %s0 = inlined_call_operand.hbm [shape: bf16[256,128], index: 0, kind: input, shape index: {}]
  %s1 = inlined_call_operand.hbm [shape: bf16[128,256], index: 1, kind: input, shape index: {}]
  %s2 = inlined_call_operand.vmem [shape: f32[1,128], index: 2, kind: input, shape index: {}]
  %s3 = inlined_call_operand.hbm [shape: bf16[256,128], index: 3, kind: output, shape index: {0}]
  %s4 = inlined_call_operand.hbm [shape: bf16[256,128], index: 4, kind: output, shape index: {1}]
  %5 = xla_tuple %s3, %s4
  %s6 = sld [smem:[#allocation0]]
  $region38: #{tpu_custom_call.1} parent=0
    _
  %s8 = ssub.s32 1, %s6
  %s9 = scalar_select 0, %s8, %s6
  $region1: #{tpu_custom_call.1} parent=0
    #allocation2 [shape = 'u8[65536]{0}', space=vmem, size = 0x10000, scoped, tag = 'input window, operand 0, single buffered']
    #allocation3 [shape = 's32[1]{0}', space=sflag, size = 0x4, scoped, tag = 'scoped memory for tpu_custom_call.1']
    #allocation4 [shape = 's32[1]{0}', space=sflag, size = 0x4, scoped, tag = 'scoped memory for tpu_custom_call.1']
    #allocation5 [shape = 'u8[65536]{0}', space=vmem, size = 0x10000, scoped, tag = 'input window, operand 1, single buffered']
    #allocation6 [shape = 's32[1]{0}', space=sflag, size = 0x4, scoped, tag = 'scoped memory for tpu_custom_call.1']
    #allocation7 [shape = 'u8[65536]{0}', space=vmem, size = 0x10000, scoped, tag = 'output window, operand 0, single buffered']
    #allocation8 [shape = 'u8[65536]{0}', space=vmem, size = 0x10000, scoped, tag = 'output window, operand 1, single buffered']
    #allocation9 [shape = 's32[1]{0}', space=sflag, size = 0x4, scoped, tag = 'scoped memory for tpu_custom_call.1']
    %10 = vsyncpa [#allocation3], 0
    %11 = vsyncpa [#allocation6], 0
    %12 = vsyncpa [#allocation4], 0
    %13 = vsyncpa [#allocation9], 0
    // Predicated region
    $region2: #{tpu_custom_call.1} parent=1 // pred_check
      _
    $region3: #{tpu_custom_call.1} parent=1 // pred_check_branch
      %15 = sbr.rel (0) target = $region5
    $region4: #{tpu_custom_call.1} parent=1 // pred_region
      %s17 = ssub.s32 2048, 2048
      %18 = vsyncadd [#allocation3], %s17
      %s19 = sshll.u32 [#allocation2], 4
      %s20 = int_to_ptr.vmem [resolvable:$true] %s19
      %25 = dma.hbm_to_vmem [thread:$0]  %s0, 2048, %s20, [#allocation3], 64, 64, 4
    $region5: #{tpu_custom_call.1} parent=1 // pred_fallthru
      _
    // Predicated region
    $region6: #{tpu_custom_call.1} parent=1 // pred_check
      _
    $region7: #{tpu_custom_call.1} parent=1 // pred_check_branch
      %27 = sbr.rel (0) target = $region9
    $region8: #{tpu_custom_call.1} parent=1 // pred_region
      %s29 = ssub.s32 2048, 2048
      %30 = vsyncadd [#allocation6], %s29
      %s31 = sshll.u32 [#allocation5], 4
      %s32 = int_to_ptr.vmem [resolvable:$true] %s31
      %37 = dma.hbm_to_vmem [thread:$0]  %s1, 2048, %s32, [#allocation6], 128, 128, 8
    $region9: #{tpu_custom_call.1} parent=1 // pred_fallthru
      _
    // Predicated region
    $region10: #{tpu_custom_call.1} parent=1 // pred_check
      _
    $region11: #{tpu_custom_call.1} parent=1 // pred_check_branch
      %39 = sbr.rel (0) target = $region13
    $region12: #{tpu_custom_call.1} parent=1 // pred_region
      _
    $region13: #{tpu_custom_call.1} parent=1 // pred_fallthru
      _
    // Predicated region
    $region14: #{tpu_custom_call.1} parent=1 // pred_check
      _
    $region15: #{tpu_custom_call.1} parent=1 // pred_check_branch
      %41 = sbr.rel (0) target = $region17
    $region16: #{tpu_custom_call.1} parent=1 // pred_region
      %42 = dma.done [#allocation3], 2048
    $region17: #{tpu_custom_call.1} parent=1 // pred_fallthru
      _
    // Predicated region
    $region18: #{tpu_custom_call.1} parent=1 // pred_check
      _
    $region19: #{tpu_custom_call.1} parent=1 // pred_check_branch
      %44 = sbr.rel (0) target = $region21
    $region20: #{tpu_custom_call.1} parent=1 // pred_region
      %45 = dma.done [#allocation6], 2048
    $region21: #{tpu_custom_call.1} parent=1 // pred_fallthru
      _
    %v47 = vld [vmem:[#allocation2] sm:$0xf]
    %v48 = vld [vmem:[#allocation2 + $0x4] sm:$0xf]
    %v49 = vld [vmem:[#allocation2 + $0x8] sm:$0xf]
    %v50 = vld [vmem:[#allocation2 + $0xc] sm:$0xf]
    %v51 = vld [vmem:[#allocation2 + $0x10] sm:$0xf]
    %v52 = vld [vmem:[#allocation2 + $0x14] sm:$0xf]
    %v53 = vld [vmem:[#allocation2 + $0x18] sm:$0xf]
    %v54 = vld [vmem:[#allocation2 + $0x1c] sm:$0xf]
    %v55 = vld [vmem:[#allocation2 + $0x20] sm:$0xf]
    %v56 = vld [vmem:[#allocation2 + $0x24] sm:$0xf]
    %v57 = vld [vmem:[#allocation2 + $0x28] sm:$0xf]
    %v58 = vld [vmem:[#allocation2 + $0x2c] sm:$0xf]
    %v59 = vld [vmem:[#allocation2 + $0x30] sm:$0xf]
    %v60 = vld [vmem:[#allocation2 + $0x34] sm:$0xf]
    %v61 = vld [vmem:[#allocation2 + $0x38] sm:$0xf]
    %v62 = vld [vmem:[#allocation2 + $0x3c] sm:$0xf]
    %v63 = vld [vmem:[#allocation2 + $0x40] sm:$0xf]
    %v64 = vld [vmem:[#allocation2 + $0x44] sm:$0xf]
    %v65 = vld [vmem:[#allocation2 + $0x48] sm:$0xf]
    %v66 = vld [vmem:[#allocation2 + $0x4c] sm:$0xf]
    %v67 = vld [vmem:[#allocation2 + $0x50] sm:$0xf]
    %v68 = vld [vmem:[#allocation2 + $0x54] sm:$0xf]
    %v69 = vld [vmem:[#allocation2 + $0x58] sm:$0xf]
    %v70 = vld [vmem:[#allocation2 + $0x5c] sm:$0xf]
    %v71 = vld [vmem:[#allocation2 + $0x60] sm:$0xf]
    %v72 = vld [vmem:[#allocation2 + $0x64] sm:$0xf]
    %v73 = vld [vmem:[#allocation2 + $0x68] sm:$0xf]
    %v74 = vld [vmem:[#allocation2 + $0x6c] sm:$0xf]
    %v75 = vld [vmem:[#allocation2 + $0x70] sm:$0xf]
    %v76 = vld [vmem:[#allocation2 + $0x74] sm:$0xf]
    %v77 = vld [vmem:[#allocation2 + $0x78] sm:$0xf]
    %v78 = vld [vmem:[#allocation2 + $0x7c] sm:$0xf]
    %v79 = vld [vmem:[#allocation5] sm:$0xff]
    %v80 = vld [vmem:[#allocation5 + $0x8] sm:$0xff]
    %v81 = vld [vmem:[#allocation5 + $0x10] sm:$0xff]
    %v82 = vld [vmem:[#allocation5 + $0x18] sm:$0xff]
    %v83 = vld [vmem:[#allocation5 + $0x20] sm:$0xff]
    %v84 = vld [vmem:[#allocation5 + $0x28] sm:$0xff]
    %v85 = vld [vmem:[#allocation5 + $0x30] sm:$0xff]
    %v86 = vld [vmem:[#allocation5 + $0x38] sm:$0xff]
    %v87 = vld [vmem:[#allocation5 + $0x40] sm:$0xff]
    %v88 = vld [vmem:[#allocation5 + $0x48] sm:$0xff]
    %v89 = vld [vmem:[#allocation5 + $0x50] sm:$0xff]
    %v90 = vld [vmem:[#allocation5 + $0x58] sm:$0xff]
    %v91 = vld [vmem:[#allocation5 + $0x60] sm:$0xff]
    %v92 = vld [vmem:[#allocation5 + $0x68] sm:$0xff]
    %v93 = vld [vmem:[#allocation5 + $0x70] sm:$0xff]
    %v94 = vld [vmem:[#allocation5 + $0x78] sm:$0xff]
    %v127 = vunpack.c.l.b16 %v47
    %v128 = vunpack.c.l.b16 %v48
    %v129 = vunpack.c.l.b16 %v49
    %v130 = vunpack.c.l.b16 %v50
    %v131 = vunpack.c.l.b16 %v51
    %v132 = vunpack.c.l.b16 %v52
    %v133 = vunpack.c.l.b16 %v53
    %v134 = vunpack.c.l.b16 %v54
    %v135 = vunpack.c.l.b16 %v55
    %v136 = vunpack.c.l.b16 %v56
    %v137 = vunpack.c.l.b16 %v57
    %v138 = vunpack.c.l.b16 %v58
    %v139 = vunpack.c.l.b16 %v59
    %v140 = vunpack.c.l.b16 %v60
    %v141 = vunpack.c.l.b16 %v61
    %v142 = vunpack.c.l.b16 %v62
    %v143 = vunpack.c.l.b16 %v63
    %v144 = vunpack.c.l.b16 %v64
    %v145 = vunpack.c.l.b16 %v65
    %v146 = vunpack.c.l.b16 %v66
    %v147 = vunpack.c.l.b16 %v67
    %v148 = vunpack.c.l.b16 %v68
    %v149 = vunpack.c.l.b16 %v69
    %v150 = vunpack.c.l.b16 %v70
    %v151 = vunpack.c.l.b16 %v71
    %v152 = vunpack.c.l.b16 %v72
    %v153 = vunpack.c.l.b16 %v73
    %v154 = vunpack.c.l.b16 %v74
    %v155 = vunpack.c.l.b16 %v75
    %v156 = vunpack.c.l.b16 %v76
    %v157 = vunpack.c.l.b16 %v77
    %v158 = vunpack.c.l.b16 %v78
    %v159 = vpack.c.b16 %v128, %v127
    %v160 = vpack.c.b16 %v130, %v129
    %v161 = vpack.c.b16 %v132, %v131
    %v162 = vpack.c.b16 %v134, %v133
    %v163 = vpack.c.b16 %v136, %v135
    %v164 = vpack.c.b16 %v138, %v137
    %v165 = vpack.c.b16 %v140, %v139
    %v166 = vpack.c.b16 %v142, %v141
    %v167 = vpack.c.b16 %v144, %v143
    %v168 = vpack.c.b16 %v146, %v145
    %v169 = vpack.c.b16 %v148, %v147
    %v170 = vpack.c.b16 %v150, %v149
    %v171 = vpack.c.b16 %v152, %v151
    %v172 = vpack.c.b16 %v154, %v153
    %v173 = vpack.c.b16 %v156, %v155
    %v174 = vpack.c.b16 %v158, %v157
    %v207 = vunpack.c.l.b16 %v79
    %v208 = vunpack.c.h.b16 %v79
    %v209 = vunpack.c.l.b16 %v80
    %v210 = vunpack.c.h.b16 %v80
    %v211 = vunpack.c.l.b16 %v81
    %v212 = vunpack.c.h.b16 %v81
    %v213 = vunpack.c.l.b16 %v82
    %v214 = vunpack.c.h.b16 %v82
    %v215 = vunpack.c.l.b16 %v83
    %v216 = vunpack.c.h.b16 %v83
    %v217 = vunpack.c.l.b16 %v84
    %v218 = vunpack.c.h.b16 %v84
    %v219 = vunpack.c.l.b16 %v85
    %v220 = vunpack.c.h.b16 %v85
    %v221 = vunpack.c.l.b16 %v86
    %v222 = vunpack.c.h.b16 %v86
    %v223 = vunpack.c.l.b16 %v87
    %v224 = vunpack.c.h.b16 %v87
    %v225 = vunpack.c.l.b16 %v88
    %v226 = vunpack.c.h.b16 %v88
    %v227 = vunpack.c.l.b16 %v89
    %v228 = vunpack.c.h.b16 %v89
    %v229 = vunpack.c.l.b16 %v90
    %v230 = vunpack.c.h.b16 %v90
    %v231 = vunpack.c.l.b16 %v91
    %v232 = vunpack.c.h.b16 %v91
    %v233 = vunpack.c.l.b16 %v92
    %v234 = vunpack.c.h.b16 %v92
    %v235 = vunpack.c.l.b16 %v93
    %v236 = vunpack.c.h.b16 %v93
    %v237 = vunpack.c.l.b16 %v94
    %v238 = vunpack.c.h.b16 %v94
    %v239 = vpack.c.b16 %v209, %v207
    %v240 = vpack.c.b16 %v210, %v208
    %v241 = vpack.c.b16 %v213, %v211
    %v242 = vpack.c.b16 %v214, %v212
    %v243 = vpack.c.b16 %v217, %v215
    %v244 = vpack.c.b16 %v218, %v216
    %v245 = vpack.c.b16 %v221, %v219
    %v246 = vpack.c.b16 %v222, %v220
    %v247 = vpack.c.b16 %v225, %v223
    %v248 = vpack.c.b16 %v226, %v224
    %v249 = vpack.c.b16 %v229, %v227
    %v250 = vpack.c.b16 %v230, %v228
    %v251 = vpack.c.b16 %v233, %v231
    %v252 = vpack.c.b16 %v234, %v232
    %v253 = vpack.c.b16 %v237, %v235
    %v254 = vpack.c.b16 %v238, %v236
    %271 = vmatprep.subr.bf16.mxu0 %v254
    %272 = vmatpush1.bf16.msra.mxu0 %v253
    %273 = vmatprep.subr.bf16.mxu0 %v252
    %274 = vmatpush1.bf16.msra.mxu0 %v251
    %275 = vmatprep.subr.bf16.mxu0 %v250
    %276 = vmatpush1.bf16.msra.mxu0 %v249
    %277 = vmatprep.subr.bf16.mxu0 %v248
    %278 = vmatpush1.bf16.msra.mxu0 %v247
    %279 = vmatprep.subr.bf16.mxu0 %v246
    %280 = vmatpush1.bf16.msra.mxu0 %v245
    %281 = vmatprep.subr.bf16.mxu0 %v244
    %282 = vmatpush1.bf16.msra.mxu0 %v243
    %283 = vmatprep.subr.bf16.mxu0 %v242
    %284 = vmatpush1.bf16.msra.mxu0 %v241
    %285 = vmatprep.subr.bf16.mxu0 %v240
    %286 = vmatpush1.bf16.msra.mxu0 %v239
    %287 = vmatprep.subr.bf16.mxu0 0
    %288 = vmatpush2.bf16.msra.mxu0 0
    %289 = vmatprep.subr.bf16.mxu0 0
    %290 = vmatpush2.bf16.msra.mxu0 0
    %291 = vmatprep.subr.bf16.mxu0 0
    %292 = vmatpush2.bf16.msra.mxu0 0
    %293 = vmatprep.subr.bf16.mxu0 0
    %294 = vmatpush2.bf16.msra.mxu0 0
    %295 = vmatprep.subr.bf16.mxu0 0
    %296 = vmatpush2.bf16.msra.mxu0 0
    %297 = vmatprep.subr.bf16.mxu0 0
    %298 = vmatpush2.bf16.msra.mxu0 0
    %299 = vmatprep.subr.bf16.mxu0 0
    %300 = vmatpush2.bf16.msra.mxu0 0
    %301 = vmatprep.subr.bf16.mxu0 0
    %302 = vmatpush2.bf16.msra.mxu0 0
    %303 = vmatprep.mubr.bf16.mxu0 0
    %304 = vmatmul.mubr.bf16.gmra.mxu0 %v159
    %v305 = vpop.f32.mrf.mxu0
    %v306 = vadd.f32 0.0, %v305
    %v307 = vpop.f32.mrf.mxu0
    %v308 = vadd.f32 0.0, %v307
    %v309 = vpop.f32.mrf.mxu0
    %v310 = vadd.f32 0.0, %v309
    %v311 = vpop.f32.mrf.mxu0
    %v312 = vadd.f32 0.0, %v311
    %313 = vmatprep.mubr.bf16.mxu0 0
    %314 = vmatmul.mubr.bf16.gmra.mxu0 %v160
    %v315 = vpop.f32.mrf.mxu0
    %v316 = vadd.f32 0.0, %v315
    %v317 = vpop.f32.mrf.mxu0
    %v318 = vadd.f32 0.0, %v317
    %v319 = vpop.f32.mrf.mxu0
    %v320 = vadd.f32 0.0, %v319
    %v321 = vpop.f32.mrf.mxu0
    %v322 = vadd.f32 0.0, %v321
    %323 = vmatprep.mubr.bf16.mxu0 0
    %324 = vmatmul.mubr.bf16.gmra.mxu0 %v161
    %v325 = vpop.f32.mrf.mxu0
    %v326 = vadd.f32 0.0, %v325
    %v327 = vpop.f32.mrf.mxu0
    %v328 = vadd.f32 0.0, %v327
    %v329 = vpop.f32.mrf.mxu0
    %v330 = vadd.f32 0.0, %v329
    %v331 = vpop.f32.mrf.mxu0
    %v332 = vadd.f32 0.0, %v331
    %333 = vmatprep.mubr.bf16.mxu0 0
    %334 = vmatmul.mubr.bf16.gmra.mxu0 %v162
    %v335 = vpop.f32.mrf.mxu0
    %v336 = vadd.f32 0.0, %v335
    %v337 = vpop.f32.mrf.mxu0
    %v338 = vadd.f32 0.0, %v337
    %v339 = vpop.f32.mrf.mxu0
    %v340 = vadd.f32 0.0, %v339
    %v341 = vpop.f32.mrf.mxu0
    %v342 = vadd.f32 0.0, %v341
    %343 = vmatprep.mubr.bf16.mxu0 0
    %344 = vmatmul.mubr.bf16.gmra.mxu0 %v163
    %v345 = vpop.f32.mrf.mxu0
    %v346 = vadd.f32 0.0, %v345
    %v347 = vpop.f32.mrf.mxu0
    %v348 = vadd.f32 0.0, %v347
    %v349 = vpop.f32.mrf.mxu0
    %v350 = vadd.f32 0.0, %v349
    %v351 = vpop.f32.mrf.mxu0
    %v352 = vadd.f32 0.0, %v351
    %353 = vmatprep.mubr.bf16.mxu0 0
    %354 = vmatmul.mubr.bf16.gmra.mxu0 %v164
    %v355 = vpop.f32.mrf.mxu0
    %v356 = vadd.f32 0.0, %v355
    %v357 = vpop.f32.mrf.mxu0
    %v358 = vadd.f32 0.0, %v357
    %v359 = vpop.f32.mrf.mxu0
    %v360 = vadd.f32 0.0, %v359
    %v361 = vpop.f32.mrf.mxu0
    %v362 = vadd.f32 0.0, %v361
    %363 = vmatprep.mubr.bf16.mxu0 0
    %364 = vmatmul.mubr.bf16.gmra.mxu0 %v165
    %v365 = vpop.f32.mrf.mxu0
    %v366 = vadd.f32 0.0, %v365
    %v367 = vpop.f32.mrf.mxu0
    %v368 = vadd.f32 0.0, %v367
    %v369 = vpop.f32.mrf.mxu0
    %v370 = vadd.f32 0.0, %v369
    %v371 = vpop.f32.mrf.mxu0
    %v372 = vadd.f32 0.0, %v371
    %373 = vmatprep.mubr.bf16.mxu0 0
    %374 = vmatmul.mubr.bf16.gmra.mxu0 %v166
    %v375 = vpop.f32.mrf.mxu0
    %v376 = vadd.f32 0.0, %v375
    %v377 = vpop.f32.mrf.mxu0
    %v378 = vadd.f32 0.0, %v377
    %v379 = vpop.f32.mrf.mxu0
    %v380 = vadd.f32 0.0, %v379
    %v381 = vpop.f32.mrf.mxu0
    %v382 = vadd.f32 0.0, %v381
    %383 = vmatprep.mubr.bf16.mxu0 0
    %384 = vmatmul.mubr.bf16.gmra.mxu0 %v167
    %v385 = vpop.f32.mrf.mxu0
    %v386 = vadd.f32 0.0, %v385
    %v387 = vpop.f32.mrf.mxu0
    %v388 = vadd.f32 0.0, %v387
    %v389 = vpop.f32.mrf.mxu0
    %v390 = vadd.f32 0.0, %v389
    %v391 = vpop.f32.mrf.mxu0
    %v392 = vadd.f32 0.0, %v391
    %393 = vmatprep.mubr.bf16.mxu0 0
    %394 = vmatmul.mubr.bf16.gmra.mxu0 %v168
    %v395 = vpop.f32.mrf.mxu0
    %v396 = vadd.f32 0.0, %v395
    %v397 = vpop.f32.mrf.mxu0
    %v398 = vadd.f32 0.0, %v397
    %v399 = vpop.f32.mrf.mxu0
    %v400 = vadd.f32 0.0, %v399
    %v401 = vpop.f32.mrf.mxu0
    %v402 = vadd.f32 0.0, %v401
    %403 = vmatprep.mubr.bf16.mxu0 0
    %404 = vmatmul.mubr.bf16.gmra.mxu0 %v169
    %v405 = vpop.f32.mrf.mxu0
    %v406 = vadd.f32 0.0, %v405
    %v407 = vpop.f32.mrf.mxu0
    %v408 = vadd.f32 0.0, %v407
    %v409 = vpop.f32.mrf.mxu0
    %v410 = vadd.f32 0.0, %v409
    %v411 = vpop.f32.mrf.mxu0
    %v412 = vadd.f32 0.0, %v411
    %413 = vmatprep.mubr.bf16.mxu0 0
    %414 = vmatmul.mubr.bf16.gmra.mxu0 %v170
    %v415 = vpop.f32.mrf.mxu0
    %v416 = vadd.f32 0.0, %v415
    %v417 = vpop.f32.mrf.mxu0
    %v418 = vadd.f32 0.0, %v417
    %v419 = vpop.f32.mrf.mxu0
    %v420 = vadd.f32 0.0, %v419
    %v421 = vpop.f32.mrf.mxu0
    %v422 = vadd.f32 0.0, %v421
    %423 = vmatprep.mubr.bf16.mxu0 0
    %424 = vmatmul.mubr.bf16.gmra.mxu0 %v171
    %v425 = vpop.f32.mrf.mxu0
    %v426 = vadd.f32 0.0, %v425
    %v427 = vpop.f32.mrf.mxu0
    %v428 = vadd.f32 0.0, %v427
    %v429 = vpop.f32.mrf.mxu0
    %v430 = vadd.f32 0.0, %v429
    %v431 = vpop.f32.mrf.mxu0
    %v432 = vadd.f32 0.0, %v431
    %433 = vmatprep.mubr.bf16.mxu0 0
    %434 = vmatmul.mubr.bf16.gmra.mxu0 %v172
    %v435 = vpop.f32.mrf.mxu0
    %v436 = vadd.f32 0.0, %v435
    %v437 = vpop.f32.mrf.mxu0
    %v438 = vadd.f32 0.0, %v437
    %v439 = vpop.f32.mrf.mxu0
    %v440 = vadd.f32 0.0, %v439
    %v441 = vpop.f32.mrf.mxu0
    %v442 = vadd.f32 0.0, %v441
    %443 = vmatprep.mubr.bf16.mxu0 0
    %444 = vmatmul.mubr.bf16.gmra.mxu0 %v173
    %v445 = vpop.f32.mrf.mxu0
    %v446 = vadd.f32 0.0, %v445
    %v447 = vpop.f32.mrf.mxu0
    %v448 = vadd.f32 0.0, %v447
    %v449 = vpop.f32.mrf.mxu0
    %v450 = vadd.f32 0.0, %v449
    %v451 = vpop.f32.mrf.mxu0
    %v452 = vadd.f32 0.0, %v451
    %453 = vmatprep.mubr.bf16.mxu0 0
    %454 = vmatmul.mubr.bf16.gmra.mxu0 %v174
    %v455 = vpop.f32.mrf.mxu0
    %v456 = vadd.f32 0.0, %v455
    %v457 = vpop.f32.mrf.mxu0
    %v458 = vadd.f32 0.0, %v457
    %v459 = vpop.f32.mrf.mxu0
    %v460 = vadd.f32 0.0, %v459
    %v461 = vpop.f32.mrf.mxu0
    %v462 = vadd.f32 0.0, %v461
    %463 = vdwg.mxu0
    %v464 = vpack.c.bf16 %v310, %v306
    %v465 = vpack.c.bf16 %v320, %v316
    %v466 = vpack.c.bf16 %v330, %v326
    %v467 = vpack.c.bf16 %v340, %v336
    %v468 = vpack.c.bf16 %v350, %v346
    %v469 = vpack.c.bf16 %v360, %v356
    %v470 = vpack.c.bf16 %v370, %v366
    %v471 = vpack.c.bf16 %v380, %v376
    %v472 = vpack.c.bf16 %v390, %v386
    %v473 = vpack.c.bf16 %v400, %v396
    %v474 = vpack.c.bf16 %v410, %v406
    %v475 = vpack.c.bf16 %v420, %v416
    %v476 = vpack.c.bf16 %v430, %v426
    %v477 = vpack.c.bf16 %v440, %v436
    %v478 = vpack.c.bf16 %v450, %v446
    %v479 = vpack.c.bf16 %v460, %v456
    %v496 = vunpack.c.l.b16 %v464
    %v497 = vunpack.c.h.b16 %v464
    %v498 = vunpack.c.l.b16 %v465
    %v499 = vunpack.c.h.b16 %v465
    %v500 = vunpack.c.l.b16 %v466
    %v501 = vunpack.c.h.b16 %v466
    %v502 = vunpack.c.l.b16 %v467
    %v503 = vunpack.c.h.b16 %v467
    %v504 = vunpack.c.l.b16 %v468
    %v505 = vunpack.c.h.b16 %v468
    %v506 = vunpack.c.l.b16 %v469
    %v507 = vunpack.c.h.b16 %v469
    %v508 = vunpack.c.l.b16 %v470
    %v509 = vunpack.c.h.b16 %v470
    %v510 = vunpack.c.l.b16 %v471
    %v511 = vunpack.c.h.b16 %v471
    %v512 = vunpack.c.l.b16 %v472
    %v513 = vunpack.c.h.b16 %v472
    %v514 = vunpack.c.l.b16 %v473
    %v515 = vunpack.c.h.b16 %v473
    %v516 = vunpack.c.l.b16 %v474
    %v517 = vunpack.c.h.b16 %v474
    %v518 = vunpack.c.l.b16 %v475
    %v519 = vunpack.c.h.b16 %v475
    %v520 = vunpack.c.l.b16 %v476
    %v521 = vunpack.c.h.b16 %v476
    %v522 = vunpack.c.l.b16 %v477
    %v523 = vunpack.c.h.b16 %v477
    %v524 = vunpack.c.l.b16 %v478
    %v525 = vunpack.c.h.b16 %v478
    %v526 = vunpack.c.l.b16 %v479
    %v527 = vunpack.c.h.b16 %v479
    %v528 = vpack.c.b16 %v496, %v496
    %v529 = vpack.c.b16 %v497, %v497
    %v530 = vpack.c.b16 %v498, %v498
    %v531 = vpack.c.b16 %v499, %v499
    %v532 = vpack.c.b16 %v500, %v500
    %v533 = vpack.c.b16 %v501, %v501
    %v534 = vpack.c.b16 %v502, %v502
    %v535 = vpack.c.b16 %v503, %v503
    %v536 = vpack.c.b16 %v504, %v504
    %v537 = vpack.c.b16 %v505, %v505
    %v538 = vpack.c.b16 %v506, %v506
    %v539 = vpack.c.b16 %v507, %v507
    %v540 = vpack.c.b16 %v508, %v508
    %v541 = vpack.c.b16 %v509, %v509
    %v542 = vpack.c.b16 %v510, %v510
    %v543 = vpack.c.b16 %v511, %v511
    %v544 = vpack.c.b16 %v512, %v512
    %v545 = vpack.c.b16 %v513, %v513
    %v546 = vpack.c.b16 %v514, %v514
    %v547 = vpack.c.b16 %v515, %v515
    %v548 = vpack.c.b16 %v516, %v516
    %v549 = vpack.c.b16 %v517, %v517
    %v550 = vpack.c.b16 %v518, %v518
    %v551 = vpack.c.b16 %v519, %v519
    %v552 = vpack.c.b16 %v520, %v520
    %v553 = vpack.c.b16 %v521, %v521
    %v554 = vpack.c.b16 %v522, %v522
    %v555 = vpack.c.b16 %v523, %v523
    %v556 = vpack.c.b16 %v524, %v524
    %v557 = vpack.c.b16 %v525, %v525
    %v558 = vpack.c.b16 %v526, %v526
    %v559 = vpack.c.b16 %v527, %v527
    %592 = vst [vmem:[#allocation7] sm:$0xf] %v528
    %593 = vst [vmem:[#allocation7 + $0x4] sm:$0xf] %v529
    %594 = vst [vmem:[#allocation7 + $0x8] sm:$0xf] %v530
    %595 = vst [vmem:[#allocation7 + $0xc] sm:$0xf] %v531
    %596 = vst [vmem:[#allocation7 + $0x10] sm:$0xf] %v532
    %597 = vst [vmem:[#allocation7 + $0x14] sm:$0xf] %v533
    %598 = vst [vmem:[#allocation7 + $0x18] sm:$0xf] %v534
    %599 = vst [vmem:[#allocation7 + $0x1c] sm:$0xf] %v535
    %600 = vst [vmem:[#allocation7 + $0x20] sm:$0xf] %v536
    %601 = vst [vmem:[#allocation7 + $0x24] sm:$0xf] %v537
    %602 = vst [vmem:[#allocation7 + $0x28] sm:$0xf] %v538
    %603 = vst [vmem:[#allocation7 + $0x2c] sm:$0xf] %v539
    %604 = vst [vmem:[#allocation7 + $0x30] sm:$0xf] %v540
    %605 = vst [vmem:[#allocation7 + $0x34] sm:$0xf] %v541
    %606 = vst [vmem:[#allocation7 + $0x38] sm:$0xf] %v542
    %607 = vst [vmem:[#allocation7 + $0x3c] sm:$0xf] %v543
    %608 = vst [vmem:[#allocation7 + $0x40] sm:$0xf] %v544
    %609 = vst [vmem:[#allocation7 + $0x44] sm:$0xf] %v545
    %610 = vst [vmem:[#allocation7 + $0x48] sm:$0xf] %v546
    %611 = vst [vmem:[#allocation7 + $0x4c] sm:$0xf] %v547
    %612 = vst [vmem:[#allocation7 + $0x50] sm:$0xf] %v548
    %613 = vst [vmem:[#allocation7 + $0x54] sm:$0xf] %v549
    %614 = vst [vmem:[#allocation7 + $0x58] sm:$0xf] %v550
    %615 = vst [vmem:[#allocation7 + $0x5c] sm:$0xf] %v551
    %616 = vst [vmem:[#allocation7 + $0x60] sm:$0xf] %v552
    %617 = vst [vmem:[#allocation7 + $0x64] sm:$0xf] %v553
    %618 = vst [vmem:[#allocation7 + $0x68] sm:$0xf] %v554
    %619 = vst [vmem:[#allocation7 + $0x6c] sm:$0xf] %v555
    %620 = vst [vmem:[#allocation7 + $0x70] sm:$0xf] %v556
    %621 = vst [vmem:[#allocation7 + $0x74] sm:$0xf] %v557
    %622 = vst [vmem:[#allocation7 + $0x78] sm:$0xf] %v558
    %623 = vst [vmem:[#allocation7 + $0x7c] sm:$0xf] %v559
    %v624 = vld [vmem:[%s2] sm:$0x1]
    %v626 = vlaneseq
    %v627 = vshrl.u32 %v626, 7
    %v628 = vsub.s32 0, %v627
    %v629 = vrot.slane %v624, %v628
    %v631 = vadd.f32 %v308, %v629
    %v632 = vadd.f32 %v312, %v629
    %v633 = vadd.f32 %v318, %v629
    %v634 = vadd.f32 %v322, %v629
    %v635 = vadd.f32 %v328, %v629
    %v636 = vadd.f32 %v332, %v629
    %v637 = vadd.f32 %v338, %v629
    %v638 = vadd.f32 %v342, %v629
    %v639 = vadd.f32 %v348, %v629
    %v640 = vadd.f32 %v352, %v629
    %v641 = vadd.f32 %v358, %v629
    %v642 = vadd.f32 %v362, %v629
    %v643 = vadd.f32 %v368, %v629
    %v644 = vadd.f32 %v372, %v629
    %v645 = vadd.f32 %v378, %v629
    %v646 = vadd.f32 %v382, %v629
    %v647 = vadd.f32 %v388, %v629
    %v648 = vadd.f32 %v392, %v629
    %v649 = vadd.f32 %v398, %v629
    %v650 = vadd.f32 %v402, %v629
    %v651 = vadd.f32 %v408, %v629
    %v652 = vadd.f32 %v412, %v629
    %v653 = vadd.f32 %v418, %v629
    %v654 = vadd.f32 %v422, %v629
    %v655 = vadd.f32 %v428, %v629
    %v656 = vadd.f32 %v432, %v629
    %v657 = vadd.f32 %v438, %v629
    %v658 = vadd.f32 %v442, %v629
    %v659 = vadd.f32 %v448, %v629
    %v660 = vadd.f32 %v452, %v629
    %v661 = vadd.f32 %v458, %v629
    %v662 = vadd.f32 %v462, %v629
    %v663 = vpack.c.bf16 %v632, %v631
    %v664 = vpack.c.bf16 %v634, %v633
    %v665 = vpack.c.bf16 %v636, %v635
    %v666 = vpack.c.bf16 %v638, %v637
    %v667 = vpack.c.bf16 %v640, %v639
    %v668 = vpack.c.bf16 %v642, %v641
    %v669 = vpack.c.bf16 %v644, %v643
    %v670 = vpack.c.bf16 %v646, %v645
    %v671 = vpack.c.bf16 %v648, %v647
    %v672 = vpack.c.bf16 %v650, %v649
    %v673 = vpack.c.bf16 %v652, %v651
    %v674 = vpack.c.bf16 %v654, %v653
    %v675 = vpack.c.bf16 %v656, %v655
    %v676 = vpack.c.bf16 %v658, %v657
    %v677 = vpack.c.bf16 %v660, %v659
    %v678 = vpack.c.bf16 %v662, %v661
    %v695 = vunpack.c.l.b16 %v663
    %v696 = vunpack.c.h.b16 %v663
    %v697 = vunpack.c.l.b16 %v664
    %v698 = vunpack.c.h.b16 %v664
    %v699 = vunpack.c.l.b16 %v665
    %v700 = vunpack.c.h.b16 %v665
    %v701 = vunpack.c.l.b16 %v666
    %v702 = vunpack.c.h.b16 %v666
    %v703 = vunpack.c.l.b16 %v667
    %v704 = vunpack.c.h.b16 %v667
    %v705 = vunpack.c.l.b16 %v668
    %v706 = vunpack.c.h.b16 %v668
    %v707 = vunpack.c.l.b16 %v669
    %v708 = vunpack.c.h.b16 %v669
    %v709 = vunpack.c.l.b16 %v670
    %v710 = vunpack.c.h.b16 %v670
    %v711 = vunpack.c.l.b16 %v671
    %v712 = vunpack.c.h.b16 %v671
    %v713 = vunpack.c.l.b16 %v672
    %v714 = vunpack.c.h.b16 %v672
    %v715 = vunpack.c.l.b16 %v673
    %v716 = vunpack.c.h.b16 %v673
    %v717 = vunpack.c.l.b16 %v674
    %v718 = vunpack.c.h.b16 %v674
    %v719 = vunpack.c.l.b16 %v675
    %v720 = vunpack.c.h.b16 %v675
    %v721 = vunpack.c.l.b16 %v676
    %v722 = vunpack.c.h.b16 %v676
    %v723 = vunpack.c.l.b16 %v677
    %v724 = vunpack.c.h.b16 %v677
    %v725 = vunpack.c.l.b16 %v678
    %v726 = vunpack.c.h.b16 %v678
    %v727 = vpack.c.b16 %v695, %v695
    %v728 = vpack.c.b16 %v696, %v696
    %v729 = vpack.c.b16 %v697, %v697
    %v730 = vpack.c.b16 %v698, %v698
    %v731 = vpack.c.b16 %v699, %v699
    %v732 = vpack.c.b16 %v700, %v700
    %v733 = vpack.c.b16 %v701, %v701
    %v734 = vpack.c.b16 %v702, %v702
    %v735 = vpack.c.b16 %v703, %v703
    %v736 = vpack.c.b16 %v704, %v704
    %v737 = vpack.c.b16 %v705, %v705
    %v738 = vpack.c.b16 %v706, %v706
    %v739 = vpack.c.b16 %v707, %v707
    %v740 = vpack.c.b16 %v708, %v708
    %v741 = vpack.c.b16 %v709, %v709
    %v742 = vpack.c.b16 %v710, %v710
    %v743 = vpack.c.b16 %v711, %v711
    %v744 = vpack.c.b16 %v712, %v712
    %v745 = vpack.c.b16 %v713, %v713
    %v746 = vpack.c.b16 %v714, %v714
    %v747 = vpack.c.b16 %v715, %v715
    %v748 = vpack.c.b16 %v716, %v716
    %v749 = vpack.c.b16 %v717, %v717
    %v750 = vpack.c.b16 %v718, %v718
    %v751 = vpack.c.b16 %v719, %v719
    %v752 = vpack.c.b16 %v720, %v720
    %v753 = vpack.c.b16 %v721, %v721
    %v754 = vpack.c.b16 %v722, %v722
    %v755 = vpack.c.b16 %v723, %v723
    %v756 = vpack.c.b16 %v724, %v724
    %v757 = vpack.c.b16 %v725, %v725
    %v758 = vpack.c.b16 %v726, %v726
    %791 = vst [vmem:[#allocation8] sm:$0xf] %v727
    %792 = vst [vmem:[#allocation8 + $0x4] sm:$0xf] %v728
    %793 = vst [vmem:[#allocation8 + $0x8] sm:$0xf] %v729
    %794 = vst [vmem:[#allocation8 + $0xc] sm:$0xf] %v730
    %795 = vst [vmem:[#allocation8 + $0x10] sm:$0xf] %v731
    %796 = vst [vmem:[#allocation8 + $0x14] sm:$0xf] %v732
    %797 = vst [vmem:[#allocation8 + $0x18] sm:$0xf] %v733
    %798 = vst [vmem:[#allocation8 + $0x1c] sm:$0xf] %v734
    %799 = vst [vmem:[#allocation8 + $0x20] sm:$0xf] %v735
    %800 = vst [vmem:[#allocation8 + $0x24] sm:$0xf] %v736
    %801 = vst [vmem:[#allocation8 + $0x28] sm:$0xf] %v737
    %802 = vst [vmem:[#allocation8 + $0x2c] sm:$0xf] %v738
    %803 = vst [vmem:[#allocation8 + $0x30] sm:$0xf] %v739
    %804 = vst [vmem:[#allocation8 + $0x34] sm:$0xf] %v740
    %805 = vst [vmem:[#allocation8 + $0x38] sm:$0xf] %v741
    %806 = vst [vmem:[#allocation8 + $0x3c] sm:$0xf] %v742
    %807 = vst [vmem:[#allocation8 + $0x40] sm:$0xf] %v743
    %808 = vst [vmem:[#allocation8 + $0x44] sm:$0xf] %v744
    %809 = vst [vmem:[#allocation8 + $0x48] sm:$0xf] %v745
    %810 = vst [vmem:[#allocation8 + $0x4c] sm:$0xf] %v746
    %811 = vst [vmem:[#allocation8 + $0x50] sm:$0xf] %v747
    %812 = vst [vmem:[#allocation8 + $0x54] sm:$0xf] %v748
    %813 = vst [vmem:[#allocation8 + $0x58] sm:$0xf] %v749
    %814 = vst [vmem:[#allocation8 + $0x5c] sm:$0xf] %v750
    %815 = vst [vmem:[#allocation8 + $0x60] sm:$0xf] %v751
    %816 = vst [vmem:[#allocation8 + $0x64] sm:$0xf] %v752
    %817 = vst [vmem:[#allocation8 + $0x68] sm:$0xf] %v753
    %818 = vst [vmem:[#allocation8 + $0x6c] sm:$0xf] %v754
    %819 = vst [vmem:[#allocation8 + $0x70] sm:$0xf] %v755
    %820 = vst [vmem:[#allocation8 + $0x74] sm:$0xf] %v756
    %821 = vst [vmem:[#allocation8 + $0x78] sm:$0xf] %v757
    %822 = vst [vmem:[#allocation8 + $0x7c] sm:$0xf] %v758
    // Predicated region
    $region22: #{tpu_custom_call.1} parent=1 // pred_check
      _
    $region23: #{tpu_custom_call.1} parent=1 // pred_check_branch
      %824 = sbr.rel (0) target = $region25
    $region24: #{tpu_custom_call.1} parent=1 // pred_region
      %s826 = ssub.s32 2048, 2048
      %827 = vsyncadd [#allocation4], %s826
      %s828 = sshll.u32 [#allocation7], 4
      %s829 = int_to_ptr.vmem [resolvable:$true] %s828
      %834 = dma.vmem_to_hbm [thread:$0]  %s829, 2048, %s3, [#allocation4], 64, 64, 4
    $region25: #{tpu_custom_call.1} parent=1 // pred_fallthru
      _
    // Predicated region
    $region26: #{tpu_custom_call.1} parent=1 // pred_check
      _
    $region27: #{tpu_custom_call.1} parent=1 // pred_check_branch
      %836 = sbr.rel (0) target = $region29
    $region28: #{tpu_custom_call.1} parent=1 // pred_region
      %s838 = ssub.s32 2048, 2048
      %839 = vsyncadd [#allocation9], %s838
      %s840 = sshll.u32 [#allocation8], 4
      %s841 = int_to_ptr.vmem [resolvable:$true] %s840
      %846 = dma.vmem_to_hbm [thread:$0]  %s841, 2048, %s4, [#allocation9], 64, 64, 4
    $region29: #{tpu_custom_call.1} parent=1 // pred_fallthru
      _
    // Predicated region
    $region30: #{tpu_custom_call.1} parent=1 // pred_check
      _
    $region31: #{tpu_custom_call.1} parent=1 // pred_check_branch
      %848 = sbr.rel (0) target = $region33
    $region32: #{tpu_custom_call.1} parent=1 // pred_region
      %849 = dma.done [#allocation4], 2048
    $region33: #{tpu_custom_call.1} parent=1 // pred_fallthru
      _
    // Predicated region
    $region34: #{tpu_custom_call.1} parent=1 // pred_check
      _
    $region35: #{tpu_custom_call.1} parent=1 // pred_check_branch
      %851 = sbr.rel (0) target = $region37
    $region36: #{tpu_custom_call.1} parent=1 // pred_region
      %852 = dma.done [#allocation9], 2048
    $region37: #{tpu_custom_call.1} parent=1 // pred_fallthru
      _
    %853 = vsyncpa [#allocation3], 1
    %854 = vsyncpa [#allocation6], 1
    %855 = vsyncpa [#allocation4], 1
    %856 = vsyncpa [#allocation9], 1

</llo_original>
